<compile_context>
chip_gen: v5e
topology: v5e:2x2
jax: 0.10.0
libtpu: 0.0.40
codegen_flags: <defaults>
</compile_context>

<pallas_src>
import functools

import jax
import jax.numpy as jnp
from jax.experimental import pallas as pl
from jax.experimental.pallas import tpu as pltpu


def _round_up(v, m):
    return ((v + m - 1) // m) * m


def _vmem_limit_bytes():
    """Generation-aware VMEM budget (≈100 MiB on 128 MiB parts, ≈48 MiB on v7x)."""
    try:
        cap = int(pltpu.get_tpu_info().vmem_capacity_bytes)
    except Exception:
        cap = 128 * 1024 * 1024
    return int(min(max(cap - 16 * 2**20, 32 * 2**20), 100 * 2**20))


def _bf16_vpu_ok():
    """bf16 elementwise on the VPU is native on v6e+/v7x; keep f32 on v5e and older."""
    try:
        kind = jax.devices()[0].device_kind.lower()
    except Exception:
        return True
    return not any(t in kind for t in ("v2", "v3", "v4", "v5"))


# ----------------------------------------------------------------------------
# Pallas kernel 1: offset-generator 3x3/s1/p1 conv as a lane-dense, transposed
# matmul.  Output block (c_pg, TN) is channels-first and lane-dense, so stores
# are unmasked and no NCHW transpose is needed afterwards.
# ----------------------------------------------------------------------------
def _offset_conv_kernel(p_ref, w_ref, b_ref, o_ref):
    o_ref[...] = (
        jnp.dot(w_ref[...], p_ref[...], preferred_element_type=jnp.float32)
        + b_ref[...]
    )


def offset_generator_pallas(x, pg_weight, pg_bias, *, tn=512):
    B, C, H, W = x.shape
    c_pg = pg_weight.shape[0]
    HW = H * W
    CK = C * 9
    tn = _round_up(max(128, min(tn, _round_up(HW, 128))), 128)
    n_t = -(-HW // tn)
    HW_pad = n_t * tn

    # bf16 shifted-window patches laid out (B, C*9, HW): no transpose anywhere.
    xp = jnp.pad(x.astype(jnp.float32), ((0, 0), (0, 0), (1, 1), (1, 1))).astype(jnp.bfloat16)
    cols = [xp[:, :, dh:dh + H, dw:dw + W] for dh in range(3) for dw in range(3)]
    patches = jnp.stack(cols, axis=2).reshape(B, CK, HW)
    patches = jnp.pad(patches, ((0, 0), (0, 0), (0, HW_pad - HW)))

    w_mat = pg_weight.reshape(c_pg, CK).astype(jnp.bfloat16)
    b_col = pg_bias.reshape(c_pg, 1).astype(jnp.float32)

    out = pl.pallas_call(
        _offset_conv_kernel,
        out_shape=jax.ShapeDtypeStruct((B, c_pg, HW_pad), jnp.float32),
        grid=(B, n_t),
        in_specs=[
            pl.BlockSpec((None, CK, tn), lambda b, t: (b, 0, t)),
            pl.BlockSpec((c_pg, CK), lambda b, t: (0, 0)),
            pl.BlockSpec((c_pg, 1), lambda b, t: (0, 0)),
        ],
        out_specs=pl.BlockSpec((None, c_pg, tn), lambda b, t: (b, 0, t)),
        compiler_params=pltpu.CompilerParams(
            dimension_semantics=("parallel", "parallel"),
            vmem_limit_bytes=_vmem_limit_bytes()),
    )(patches, w_mat, b_col)
    return out[:, :, :HW].reshape(B, c_pg, H, W)


# ----------------------------------------------------------------------------
# Pallas kernel 2: deformable conv (torchvision deform_conv2d semantics,
# groups=1, no mask).  Grid = (B, n_q); both axes parallel.
#
# Kernel refs (after squeezes):
#   pos_ref : (2K, TQ)          f32   sampling positions, rows [h0,w0,h1,w1,...]
#   x_ref   : (C_slab, HW_in)   bf16  channel/width-padded input, lane-dense
#   w_ref   : (C_out, K*C_slab) bf16  fused conv weight
#   bias_ref: (C_out, 1)        f32
#   o_ref   : (C_out, TQ)       f32   lane-dense output tile (NCHW flat)
#   samp_ref: (K*C_slab, TQ)    bf16  VMEM scratch, 16-row aligned tap slabs
# ----------------------------------------------------------------------------
def _deform_kernel(pos_ref, x_ref, w_ref, bias_ref, o_ref, samp_ref, *,
                   K, H, W_pad, C_slab, bf16_weights):
    tq = pos_ref.shape[-1]
    x_bf = x_ref[...]                                            # (C_slab, HW_in)
    rows = jax.lax.broadcasted_iota(jnp.int32, (H, 1, tq), 0).astype(jnp.float32)
    cols = jax.lax.broadcasted_iota(jnp.int32, (1, W_pad, tq), 1).astype(jnp.float32)

    for k in range(K):                                           # static unroll
        ph = pos_ref[2 * k:2 * k + 1, :].reshape(1, 1, tq)       # f32 sample row
        pw = pos_ref[2 * k + 1:2 * k + 2, :].reshape(1, 1, tq)   # f32 sample col
        # Separable bilinear weights (coordinate math stays f32; zero-padding
        # semantics match torchvision since padded columns of x are zero).
        wh = jnp.maximum(0.0, 1.0 - jnp.abs(ph - rows))          # (H, 1, TQ)
        ww = jnp.maximum(0.0, 1.0 - jnp.abs(pw - cols))          # (1, W_pad, TQ)
        if bf16_weights:
            wgt = wh.astype(jnp.bfloat16) * ww.astype(jnp.bfloat16)
        else:
            wgt = (wh * ww).astype(jnp.bfloat16)
        wgt = wgt.reshape(H * W_pad, tq)                         # (HW_in, TQ) bf16
        samp_ref[k * C_slab:(k + 1) * C_slab, :] = jnp.dot(
            x_bf, wgt, preferred_element_type=jnp.float32).astype(jnp.bfloat16)

    # Single fused weight contraction over all K*C_slab sampled rows.
    acc = jnp.dot(w_ref[...], samp_ref[...], preferred_element_type=jnp.float32)
    o_ref[...] = acc + bias_ref[...]


def deform_conv2d_pallas(x_nchw, offset, weight, bias, *,
                         stride=1, padding=0, dilation=1, tq=256):
    B, C_in, H, W = x_nchw.shape
    C_out, C_in_w, KH, KW = weight.shape
    assert C_in_w == C_in  # groups == 1
    K = KH * KW
    H_out = (H + 2 * padding - dilation * (KH - 1) - 1) // stride + 1
    W_out = (W + 2 * padding - dilation * (KW - 1) - 1) // stride + 1
    assert offset.shape == (B, 2 * K, H_out, W_out)
    HW_out = H_out * W_out

    W_pad = _round_up(W, 16)        # keeps the (H, W_pad, TQ)->(HW_in, TQ) collapse tile-aligned
    HW_in = H * W_pad
    C_slab = _round_up(C_in, 16)    # 16-row bf16 slabs -> aligned, unmasked samp stores

    tq = _round_up(max(128, min(tq, _round_up(HW_out, 128))), 128)
    # Keep the dense bilinear tile + samp scratch comfortably inside VMEM.
    while tq > 128 and (2 * HW_in * tq * 2 + K * C_slab * tq * 2) > 24 * 2**20:
        tq -= 128
    n_q = -(-HW_out // tq)
    HW_out_pad = n_q * tq

    # Absolute fractional sampling positions: rows interleaved [h0, w0, h1, w1, ...]
    # (torchvision offset channel layout), spatial dim lane-dense.
    kh = (jnp.arange(K, dtype=jnp.int32) // KW).astype(jnp.float32)
    kw = (jnp.arange(K, dtype=jnp.int32) % KW).astype(jnp.float32)
    p = jnp.arange(HW_out, dtype=jnp.int32)
    oh = (p // W_out).astype(jnp.float32)
    ow = (p % W_out).astype(jnp.float32)
    base_h = oh[None, :] * float(stride) - float(padding) + kh[:, None] * float(dilation)
    base_w = ow[None, :] * float(stride) - float(padding) + kw[:, None] * float(dilation)
    base = jnp.stack([base_h, base_w], axis=1).reshape(2 * K, HW_out)
    pos = offset.reshape(B, 2 * K, HW_out).astype(jnp.float32) + base[None]
    pos = jnp.pad(pos, ((0, 0), (0, 0), (0, HW_out_pad - HW_out)))

    # bf16, channel- and width-padded input, spatial dim lane-dense.
    x_p = jnp.pad(x_nchw.astype(jnp.float32),
                  ((0, 0), (0, C_slab - C_in), (0, 0), (0, W_pad - W)))
    x_flat = x_p.reshape(B, C_slab, HW_in).astype(jnp.bfloat16)

    w = jnp.transpose(weight.astype(jnp.float32), (0, 2, 3, 1)).reshape(C_out, K, C_in)
    w = jnp.pad(w, ((0, 0), (0, 0), (0, C_slab - C_in)))
    w_fused = w.reshape(C_out, K * C_slab).astype(jnp.bfloat16)

    if bias is None:
        bias = jnp.zeros((C_out,), jnp.float32)
    bias_col = bias.reshape(C_out, 1).astype(jnp.float32)

    kernel = functools.partial(_deform_kernel, K=K, H=H, W_pad=W_pad,
                               C_slab=C_slab, bf16_weights=_bf16_vpu_ok())

    out_flat = pl.pallas_call(
        kernel,
        out_shape=jax.ShapeDtypeStruct((B, C_out, HW_out_pad), jnp.float32),
        grid_spec=pltpu.PrefetchScalarGridSpec(
            num_scalar_prefetch=0,
            grid=(B, n_q),
            in_specs=[
                pl.BlockSpec((None, 2 * K, tq), lambda b, q: (b, 0, q)),
                pl.BlockSpec((None, C_slab, HW_in), lambda b, q: (b, 0, 0)),
                pl.BlockSpec((C_out, K * C_slab), lambda b, q: (0, 0)),
                pl.BlockSpec((C_out, 1), lambda b, q: (0, 0)),
            ],
            out_specs=pl.BlockSpec((None, C_out, tq), lambda b, q: (b, 0, q)),
            scratch_shapes=[pltpu.VMEM((K * C_slab, tq), jnp.bfloat16)],
        ),
        compiler_params=pltpu.CompilerParams(
            dimension_semantics=("parallel", "parallel"),
            vmem_limit_bytes=_vmem_limit_bytes()),
    )(pos, x_flat, w_fused, bias_col)

    # Output is already channels-first flat: drop spatial padding and reshape.
    return out_flat[:, :, :HW_out].reshape(B, C_out, H_out, W_out)


# ----------------------------------------------------------------------------
# Module mirror of DeformableConv2d (deterministic synthetic parameters).
# ----------------------------------------------------------------------------
class DeformableConv2dPallas:
    def __init__(self, in_dim, out_dim, kernel_size, stride=1, padding=0, dilation=1,
                 groups=1, bias=True, *, offset_groups=1, with_mask=False, key=None):
        assert in_dim % groups == 0
        # TODO(synk): groups > 1 / offset_groups > 1 grouped deformable conv not implemented.
        assert groups == 1 and offset_groups == 1
        # TODO(synk): with_mask=True (DCNv2 sigmoid modulation) path not implemented.
        assert not with_mask
        self.stride = stride
        self.padding = padding
        self.dilation = dilation
        self.kernel_size = kernel_size

        k1, k2, k3, k4 = jax.random.split(key, 4)
        self.weight = 0.1 * jax.random.normal(
            k1, (out_dim, in_dim // groups, kernel_size, kernel_size), jnp.float32)
        self.bias = 0.1 * jax.random.normal(k2, (out_dim,), jnp.float32) if bias else None
        pg_out = 2 * offset_groups * kernel_size * kernel_size
        self.pg_weight = 0.1 * jax.random.normal(k3, (pg_out, in_dim, 3, 3), jnp.float32)
        self.pg_bias = 0.1 * jax.random.normal(k4, (pg_out,), jnp.float32)

    def _param_generator(self, x):
        return offset_generator_pallas(x, self.pg_weight, self.pg_bias)

    def __call__(self, x):
        offset = self._param_generator(x)
        return deform_conv2d_pallas(
            x, offset, self.weight, self.bias,
            stride=self.stride, padding=self.padding, dilation=self.dilation)


# ----------------------------------------------------------------------------
# Plain-JAX references (sanity check only).
# ----------------------------------------------------------------------------
def _ref_param_generator(x, w, b):
    out = jax.lax.conv_general_dilated(
        x, w, (1, 1), ((1, 1), (1, 1)),
        dimension_numbers=("NCHW", "OIHW", "NCHW"))
    return out + b[None, :, None, None]


def _ref_deform_conv2d(x, offset, weight, bias, stride, padding, dilation):
    B, C, H, W = x.shape
    C_out, _, KH, KW = weight.shape
    K = KH * KW
    H_out = (H + 2 * padding - dilation * (KH - 1) - 1) // stride + 1
    W_out = (W + 2 * padding - dilation * (KW - 1) - 1) // stride + 1
    off = offset.reshape(B, K, 2, H_out, W_out)
    off_h, off_w = off[:, :, 0], off[:, :, 1]
    kh = jnp.repeat(jnp.arange(KH), KW)
    kw = jnp.tile(jnp.arange(KW), KH)
    oh = jnp.arange(H_out)
    ow = jnp.arange(W_out)
    base_h = (oh[None, :, None] * stride - padding + kh[:, None, None] * dilation).astype(jnp.float32)
    base_w = (ow[None, None, :] * stride - padding + kw[:, None, None] * dilation).astype(jnp.float32)
    ph = base_h[None] + off_h          # (B, K, Ho, Wo)
    pw = base_w[None] + off_w
    xh = jnp.transpose(x, (0, 2, 3, 1))
    bidx = jnp.arange(B)[:, None, None, None]
    h0 = jnp.floor(ph)
    w0 = jnp.floor(pw)
    sampled = jnp.zeros((B, K, H_out, W_out, C), jnp.float32)
    for dh in (0.0, 1.0):
        for dw in (0.0, 1.0):
            hi = h0 + dh
            wi = w0 + dw
            wgt = jnp.maximum(0.0, 1.0 - jnp.abs(ph - hi)) * jnp.maximum(0.0, 1.0 - jnp.abs(pw - wi))
            valid = (hi >= 0) & (hi < H) & (wi >= 0) & (wi < W)
            g = xh[bidx, jnp.clip(hi, 0, H - 1).astype(jnp.int32),
                   jnp.clip(wi, 0, W - 1).astype(jnp.int32)]
            sampled = sampled + jnp.where(valid, wgt, 0.0)[..., None] * g
    w_r = weight.reshape(C_out, C, K)
    out = jnp.einsum("bkhwc,ock->bohw", sampled, w_r)
    if bias is not None:
        out = out + bias[None, :, None, None]
    return out


if __name__ == "__main__":
    key = jax.random.PRNGKey(0)
    kx, kp = jax.random.split(key)

    B, C_in, H, W = 2, 4, 16, 16
    C_out, ksize = 8, 3

    x = jax.random.normal(kx, (B, C_in, H, W), jnp.float32)
    mod = DeformableConv2dPallas(C_in, C_out, ksize, stride=1, padding=1, dilation=1,
                                 bias=True, key=kp)

    out = jax.block_until_ready(mod(x))
    assert out.shape == (B, C_out, H, W), out.shape

    # Sanity checks against plain-JAX references (bf16 MXU/VPU operands give
    # ~1e-2 absolute error worst case, well within tolerance).
    offset_pal = mod._param_generator(x)
    offset_ref = _ref_param_generator(x, mod.pg_weight, mod.pg_bias)
    assert float(jnp.max(jnp.abs(offset_pal - offset_ref))) < 5e-2

    ref = _ref_deform_conv2d(x, offset_pal, mod.weight, mod.bias, 1, 1, 1)
    assert float(jnp.max(jnp.abs(out - ref))) < 5e-2

    print("KERNEL_OK")
</pallas_src>

<mosaic_0001>
module attributes {stable_mosaic.version = 11 : i64} {
  func.func @_offset_conv_kernel(%arg0: i32, %arg1: i32, %arg2: memref<1x36x256xbf16, #tpu.memory_space<vmem>>, %arg3: memref<18x36xbf16, #tpu.memory_space<vmem>>, %arg4: memref<18x1xf32, #tpu.memory_space<vmem>>, %arg5: memref<1x18x256xf32, #tpu.memory_space<vmem>>) attributes {dimension_semantics = [#tpu.dimension_semantics<parallel>, #tpu.dimension_semantics<parallel>], iteration_bounds = array<i64: 2, 1>, scalar_prefetch = 0 : i64, scratch_operands = 0 : i64, tpu.core_type = #tpu.core_type<tc>, window_params = [{transform_indices = @transform_0, window_bounds = array<i64: 1, 36, 256>}, {pipeline_mode = #tpu.pipeline_mode<synchronous>, transform_indices = @transform_1, window_bounds = array<i64: 18, 36>}, {pipeline_mode = #tpu.pipeline_mode<synchronous>, transform_indices = @transform_2, window_bounds = array<i64: 18, 1>}, {transform_indices = @transform_3, window_bounds = array<i64: 1, 18, 256>}]} {
    %c0 = arith.constant 0 : index
    %c0_0 = arith.constant 0 : index
    %0 = vector.load %arg3[%c0, %c0_0] : memref<18x36xbf16, #tpu.memory_space<vmem>>, vector<18x36xbf16>
    %c0_1 = arith.constant 0 : index
    %c0_2 = arith.constant 0 : index
    %c0_3 = arith.constant 0 : index
    %1 = vector.load %arg2[%c0_1, %c0_2, %c0_3] : memref<1x36x256xbf16, #tpu.memory_space<vmem>>, vector<1x36x256xbf16>
    %2 = vector.shape_cast %1 : vector<1x36x256xbf16> to vector<36x256xbf16>
    %cst = arith.constant dense<0.000000e+00> : vector<18x256xf32>
    %3 = tpu.matmul %0, %2, %cst {dimension_numbers = #tpu.dot_dimension_numbers<[1], [0], [0], [1], [0, 0, 1, 1], [], []>} : vector<18x36xbf16>, vector<36x256xbf16>, vector<18x256xf32> -> vector<18x256xf32>
    %c0_4 = arith.constant 0 : index
    %c0_5 = arith.constant 0 : index
    %4 = vector.load %arg4[%c0_4, %c0_5] : memref<18x1xf32, #tpu.memory_space<vmem>>, vector<18x1xf32>
    %5 = vector.broadcast %4 : vector<18x1xf32> to vector<18x256xf32>
    %6 = arith.addf %3, %5 : vector<18x256xf32>
    %c0_6 = arith.constant 0 : index
    %c0_7 = arith.constant 0 : index
    %c0_8 = arith.constant 0 : index
    %7 = vector.load %arg5[%c0_6, %c0_7, %c0_8] : memref<1x18x256xf32, #tpu.memory_space<vmem>>, vector<1x18x256xf32>
    %8 = vector.shape_cast %7 : vector<1x18x256xf32> to vector<18x256xf32>
    %9 = vector.shape_cast %6 : vector<18x256xf32> to vector<1x18x256xf32>
    tpu.vector_store %arg5[%c0_6, %c0_7, %c0_8], %9 {strides = array<i32>} : memref<1x18x256xf32, #tpu.memory_space<vmem>>, vector<1x18x256xf32>,
    return
  }
  func.func @transform_0(%arg0: i32, %arg1: i32) -> (i32, i32, i32) {
    %c0_i32 = arith.constant 0 : i32
    %c0_i32_0 = arith.constant 0 : i32
    return %arg0, %c0_i32, %arg1 : i32, i32, i32
  }
  func.func @transform_1(%arg0: i32, %arg1: i32) -> (i32, i32) {
    %c0_i32 = arith.constant 0 : i32
    %c0_i32_0 = arith.constant 0 : i32
    %c0_i32_1 = arith.constant 0 : i32
    return %c0_i32, %c0_i32_0 : i32, i32
  }
  func.func @transform_2(%arg0: i32, %arg1: i32) -> (i32, i32) {
    %c0_i32 = arith.constant 0 : i32
    %c0_i32_0 = arith.constant 0 : i32
    %c0_i32_1 = arith.constant 0 : i32
    return %c0_i32, %c0_i32_0 : i32, i32
  }
  func.func @transform_3(%arg0: i32, %arg1: i32) -> (i32, i32, i32) {
    %c0_i32 = arith.constant 0 : i32
    %c0_i32_0 = arith.constant 0 : i32
    return %arg0, %c0_i32, %arg1 : i32, i32, i32
  }
}

</mosaic_0001>

<llo_original>
// kernel: tpu_custom_call.1
$region0: #{tpu_custom_call.1}
  #allocation0 [shape = 'u32[]', space=smem, size = 0x4, offset = 0x4, fixed_abs, tag = 'smem constant byte address 0x4 - core index']
  #allocation1 [shape = 'u32[72,128]{1,0:T(1,128)}', space=vmem, size = 0x9000, scoped, tag = 'internal scratch']
  %s0 = inlined_call_operand.vmem [shape: bf16[2,36,256], index: 0, kind: input, shape index: {}]
  %s1 = inlined_call_operand.vmem [shape: bf16[18,36], index: 1, kind: input, shape index: {}]
  %s2 = inlined_call_operand.vmem [shape: f32[18,1], index: 2, kind: input, shape index: {}]
  %s3 = inlined_call_operand.vmem [shape: f32[2,18,256], index: 3, kind: output, shape index: {}]
  %s4 = sld [smem:[#allocation0]]
  $region45: #{tpu_custom_call.1} parent=0
    _
  %s6 = ssub.s32 1, %s4
  %s7 = scalar_select 0, %s6, %s4
  loop: start=0, step=1, limit=4
  $region2: #{tpu_custom_call.1} parent=0 // loop_pre_header
    _
  $region3: #{tpu_custom_call.1} parent=0 // loop_header
    %s9 = sphi 0, %s13
    %p10 = scmp.ge.s32.totalorder %s9, 4
    %s16 = sphi 0, %s28
    %s17 = sphi 0, %s24
    %s18 = sphi 0, %s16
    %s19 = sphi 0, %s17
    %s20 = sphi 0, %s18
    %s21 = sphi 0, %s19
    %s33 = sphi 0, %s35
    %s36 = sphi 0, %s33
    %s37 = sphi 0, %s36
    %s53 = sphi 0, %s37
    %s57 = sphi 0, %s57
    %s59 = sphi 0, %s57
    %s60 = sphi 0, %s59
    %s74 = sphi 0, %s60
    %s78 = sphi 0, %s78
    %s80 = sphi 0, %s78
    %s81 = sphi 0, %s80
    %s95 = sphi 0, %s81
    %s103 = sphi 0, %s105
    %s106 = sphi 0, %s103
    %s107 = sphi 0, %s106
    %s123 = sphi 0, %s107
  $region4: #{tpu_custom_call.1} parent=0 // loop_header_branch
    %12 = sbr.rel (%p10) target = $region8
  $region5: #{tpu_custom_call.1} parent=0 // loop_body
    %s14 = ssub.s32 %s9, 1
    %s15 = ssub.s32 %s9, 2
    %s22 = sadd.s32 1, %s17
    %p23 = scmp.ge.s32.totalorder %s22, 1
    %s24 = scalar_select %p23, 0, %s22
    %s25 = sadd.s32 1, %s16
    %s26 = scalar_select %p23, %s25, %s16
    %p27 = scmp.ge.s32.totalorder %s26, 2
    %s28 = scalar_select %p27, 0, %s26
    %s29 = ssub.s32 %s16, %s28
    %s30 = ssub.s32 %s17, %s24
    %s31 = sor.u32 %s29, %s30
    %p32 = scmp.eq.s32.totalorder %s31, 0
    %s34 = sadd.s32 %s33, 1
    %s35 = scalar_select %p32, %s33, %s34
    %p38 = pneg %p32
    %p39 = scmp.eq.s32.totalorder %s9, 1
    %p40 = por %p38, %p39
    %p41 = scmp.ne.s32.totalorder %s33, %s36
    %p42 = scmp.eq.s32.totalorder %s9, 0
    %p43 = por %p41, %p42
    %p44 = scmp.ne.s32.totalorder %s33, %s36
    %p45 = scmp.eq.s32.totalorder %s14, 1
    %p46 = por %p44, %p45
    %p47 = scmp.ne.s32.totalorder %s36, %s37
    %p48 = scmp.eq.s32.totalorder %s14, 0
    %p49 = por %p47, %p48
    %p50 = scmp.ne.s32.totalorder %s36, %s37
    %p51 = scmp.eq.s32.totalorder %s15, 1
    %p52 = por %p50, %p51
    %p54 = scmp.ne.s32.totalorder %s37, %s53
    %p55 = scmp.eq.s32.totalorder %s15, 0
    %p56 = por %p54, %p55
    %s58 = sadd.s32 %s57, 1
    %p61 = scmp.eq.s32.totalorder %s9, 1
    %p62 = scmp.ne.s32.totalorder %s57, %s59
    %p63 = scmp.eq.s32.totalorder %s9, 0
    %p64 = por %p62, %p63
    %p65 = scmp.ne.s32.totalorder %s57, %s59
    %p66 = scmp.eq.s32.totalorder %s14, 1
    %p67 = por %p65, %p66
    %p68 = scmp.ne.s32.totalorder %s59, %s60
    %p69 = scmp.eq.s32.totalorder %s14, 0
    %p70 = por %p68, %p69
    %p71 = scmp.ne.s32.totalorder %s59, %s60
    %p72 = scmp.eq.s32.totalorder %s15, 1
    %p73 = por %p71, %p72
    %p75 = scmp.ne.s32.totalorder %s60, %s74
    %p76 = scmp.eq.s32.totalorder %s15, 0
    %p77 = por %p75, %p76
    %s79 = sadd.s32 %s78, 1
    %p82 = scmp.eq.s32.totalorder %s9, 1
    %p83 = scmp.ne.s32.totalorder %s78, %s80
    %p84 = scmp.eq.s32.totalorder %s9, 0
    %p85 = por %p83, %p84
    %p86 = scmp.ne.s32.totalorder %s78, %s80
    %p87 = scmp.eq.s32.totalorder %s14, 1
    %p88 = por %p86, %p87
    %p89 = scmp.ne.s32.totalorder %s80, %s81
    %p90 = scmp.eq.s32.totalorder %s14, 0
    %p91 = por %p89, %p90
    %p92 = scmp.ne.s32.totalorder %s80, %s81
    %p93 = scmp.eq.s32.totalorder %s15, 1
    %p94 = por %p92, %p93
    %p96 = scmp.ne.s32.totalorder %s81, %s95
    %p97 = scmp.eq.s32.totalorder %s15, 0
    %p98 = por %p96, %p97
    %s99 = ssub.s32 %s16, %s28
    %s100 = ssub.s32 %s17, %s24
    %s101 = sor.u32 %s99, %s100
    %p102 = scmp.eq.s32.totalorder %s101, 0
    %s104 = sadd.s32 %s103, 1
    %s105 = scalar_select %p102, %s103, %s104
    %p108 = pneg %p102
    %p109 = scmp.eq.s32.totalorder %s9, 1
    %p110 = por %p108, %p109
    %p111 = scmp.ne.s32.totalorder %s103, %s106
    %p112 = scmp.eq.s32.totalorder %s9, 0
    %p113 = por %p111, %p112
    %p114 = scmp.ne.s32.totalorder %s103, %s106
    %p115 = scmp.eq.s32.totalorder %s14, 1
    %p116 = por %p114, %p115
    %p117 = scmp.ne.s32.totalorder %s106, %s107
    %p118 = scmp.eq.s32.totalorder %s14, 0
    %p119 = por %p117, %p118
    %p120 = scmp.ne.s32.totalorder %s106, %s107
    %p121 = scmp.eq.s32.totalorder %s15, 1
    %p122 = por %p120, %p121
    %p124 = scmp.ne.s32.totalorder %s107, %s123
    %p125 = scmp.eq.s32.totalorder %s15, 0
    %p126 = por %p124, %p125
    %p127 = scmp.le.s32.totalorder 1, %s9
    %p128 = scmp.lt.s32.totalorder %s9, 3
    %p129 = pnand %p127, %p128
    %p130 = pneg %p129
    // Predicated region
    $region9: #{tpu_custom_call.1} parent=5 // pred_check
      _
    $region10: #{tpu_custom_call.1} parent=5 // pred_check_branch
      %132 = sbr.rel (%p129) target = $region12
    $region11: #{tpu_custom_call.1} parent=5 // pred_region
      %s133 = ssub.s32 %s9, 1
      // Predicated region
      $region13: #{tpu_custom_call.1} parent=11 // pred_check
        %p134 = pneg %p70
      $region14: #{tpu_custom_call.1} parent=11 // pred_check_branch
        %136 = sbr.rel (%p134) target = $region16
      $region15: #{tpu_custom_call.1} parent=11 // pred_region
        _
      $region16: #{tpu_custom_call.1} parent=11 // pred_fallthru
        _
      // Predicated region
      $region17: #{tpu_custom_call.1} parent=11 // pred_check
        %p137 = pneg %p91
      $region18: #{tpu_custom_call.1} parent=11 // pred_check_branch
        %139 = sbr.rel (%p137) target = $region20
      $region19: #{tpu_custom_call.1} parent=11 // pred_region
        _
      $region20: #{tpu_custom_call.1} parent=11 // pred_fallthru
        _
    $region12: #{tpu_custom_call.1} parent=5 // pred_fallthru
      _
    %p140 = scmp.lt.s32.totalorder %s9, 2
    // Predicated region
    $region21: #{tpu_custom_call.1} parent=5 // pred_check
      %p141 = pneg %p140
    $region22: #{tpu_custom_call.1} parent=5 // pred_check_branch
      %143 = sbr.rel (%p141) target = $region24
    $region23: #{tpu_custom_call.1} parent=5 // pred_region
      // Predicated region
      $region25: #{tpu_custom_call.1} parent=23 // pred_check
        %p144 = pneg %p43
      $region26: #{tpu_custom_call.1} parent=23 // pred_check_branch
        %146 = sbr.rel (%p144) target = $region28
      $region27: #{tpu_custom_call.1} parent=23 // pred_region
        %s147 = smul.u32 2, %s17
        %p148 = scmp.lt.s32.totalorder %s16, 1
        %s149 = scalar_select %p148, %s16, 1
        %p150 = scmp.lt.s32.totalorder %s147, 1
        %s151 = scalar_select %p150, %s147, 1
        %s152 = smul.addr %s149, 10
        %s153 = sadd.s32 %s151, %s152
        %s154 = smul.addr %s153, 4
        %s155 = scalar_lea.vmem %s0, %s154
        %s156 = smul.u32 2, %s17
      $region28: #{tpu_custom_call.1} parent=23 // pred_fallthru
        _
    $region24: #{tpu_custom_call.1} parent=5 // pred_fallthru
      _
    %p157 = scmp.le.s32.totalorder 1, %s9
    %p158 = scmp.lt.s32.totalorder %s9, 3
    %p159 = pnand %p157, %p158
    %p160 = pneg %p159
    // Predicated region
    $region29: #{tpu_custom_call.1} parent=5 // pred_check
      _
    $region30: #{tpu_custom_call.1} parent=5 // pred_check_branch
      %162 = sbr.rel (%p159) target = $region32
    $region31: #{tpu_custom_call.1} parent=5 // pred_region
      %s163 = ssub.s32 %s9, 1
      %s164 = smul.u32 2, %s19
      %p165 = scmp.lt.s32.totalorder %s18, 1
      %s166 = scalar_select %p165, %s18, 1
      %p167 = scmp.lt.s32.totalorder %s164, 1
      %s168 = scalar_select %p167, %s164, 1
      %s169 = smul.addr %s166, 10
      %s170 = sadd.s32 %s168, %s169
      %s171 = smul.addr %s170, 4
      %s172 = scalar_lea.vmem %s0, %s171
      %p173 = pneg %p49
      %p174 = pneg %p46
      %p175 = pneg %p70
      %p176 = pneg %p67
      %p177 = pneg %p91
      %p178 = pneg %p88
      %p179 = pneg %p119
      %p180 = pneg %p116
      %s181 = smul.u32 2, %s19
      %p182 = scmp.lt.s32.totalorder %s18, 1
      %s183 = scalar_select %p182, %s18, 1
      %p184 = scmp.lt.s32.totalorder %s181, 1
      %s185 = scalar_select %p184, %s181, 1
      %s186 = smul.addr %s183, 6
      %s187 = sadd.s32 %s185, %s186
      %s188 = smul.addr %s187, 8
      %s189 = scalar_lea.vmem %s3, %s188
      %s190 = smul.u32 2, %s19
      %p191 = scmp.lt.s32.totalorder %s18, 1
      %s192 = scalar_select %p191, %s18, 1
      %p193 = scmp.lt.s32.totalorder %s190, 1
      %s194 = scalar_select %p193, %s190, 1
      %s195 = smul.addr %s192, 10
      %s196 = sadd.s32 %s194, %s195
      %s197 = smul.addr %s196, 4
      %s198 = scalar_lea.vmem %s0, %s197
      %s199 = smul.u32 2, %s19
      %s200 = smul.u32 2, %s19
      %p201 = scmp.lt.s32.totalorder %s18, 1
      %s202 = scalar_select %p201, %s18, 1
      %p203 = scmp.lt.s32.totalorder %s200, 1
      %s204 = scalar_select %p203, %s200, 1
      %s205 = smul.addr %s202, 6
      %s206 = sadd.s32 %s204, %s205
      %s207 = smul.addr %s206, 8
      %s208 = scalar_lea.vmem %s3, %s207
      %s209 = smul.u32 2, %s19
      %v211 = vld [vmem:[%s1] sm:$0xf]
      %v212 = vld [vmem:[%s1 + $0x4] sm:$0xf]
      %v213 = vld [vmem:[%s1 + $0x8] sm:$0x1]
      %v214 = vld [vmem:[%s198] sm:$0xff]
      %v215 = vld [vmem:[%s198 + $0x8] sm:$0xff]
      %v216 = vld [vmem:[%s198 + $0x10] sm:$0xff]
      %v217 = vld [vmem:[%s198 + $0x18] sm:$0xff]
      %v218 = vld [vmem:[%s198 + $0x20] sm:$0x33]
      %v219 = vld [vmem:[%s2] sm:$0xff]
      %v220 = vld [vmem:[%s2 + $0x8] sm:$0xff]
      %v221 = vld [vmem:[%s2 + $0x10] sm:$0x3]
      %223 = vset.pattern.permute.xlu0 0
      %224 = vperm.xlu0 %223, %v219
      %v225 = vpop.permute.xlu0 %224
      %228 = vset.pattern.permute.xlu0 0
      %229 = vperm.xlu0 %228, %v220
      %v230 = vpop.permute.xlu0 %229
      %233 = vset.pattern.permute.xlu0 0
      %234 = vperm.xlu0 %233, %v221
      %v235 = vpop.permute.xlu0 %234
      %v240 = vunpack.c.l.b16 %v211
      %v241 = vunpack.c.l.b16 %v212
      %v242 = vunpack.c.l.b16 %v213
      %v243 = vpack.c.b16 %v241, %v240
      %v244 = vpack.c.b16 %v242, %v242
      %v250 = vunpack.c.l.b16 %v214
      %v251 = vunpack.c.h.b16 %v214
      %v252 = vunpack.c.l.b16 %v215
      %v253 = vunpack.c.h.b16 %v215
      %v254 = vunpack.c.l.b16 %v216
      %v255 = vunpack.c.h.b16 %v216
      %v256 = vunpack.c.l.b16 %v217
      %v257 = vunpack.c.h.b16 %v217
      %v258 = vunpack.c.l.b16 %v218
      %v259 = vunpack.c.h.b16 %v218
      %v260 = vpack.c.b16 %v252, %v250
      %v261 = vpack.c.b16 %v253, %v251
      %v262 = vpack.c.b16 %v256, %v254
      %v263 = vpack.c.b16 %v257, %v255
      %v264 = vpack.c.b16 %v258, %v258
      %v265 = vpack.c.b16 %v259, %v259
      %vm270 = vcmask 293888
      %v272 = vsel %vm270, %v243, 0
      %v275 = vsel %vm270, %v244, 0
      %vm277 = vcmask 1041408
      %v279 = vsel %vm277, %v264, 0
      %v282 = vsel %vm277, %v265, 0
      %284 = vmatpush.bf16.msra.mxu0 0
      %285 = vmatpush.bf16.msra.mxu0 0
      %286 = vmatpush.bf16.msra.mxu0 0
      %287 = vmatpush.bf16.msra.mxu0 0
      %288 = vmatpush.bf16.msra.mxu0 0
      %289 = vmatpush.bf16.msra.mxu0 %v279
      %290 = vmatpush.bf16.msra.mxu0 %v262
      %291 = vmatpush.bf16.msra.mxu0 %v260
      %292 = vmatmul.bf16.gmra.mxu0 %v272
      %v293 = vpop.f32.mrf.mxu0
      %v294 = vadd.f32 %v225, %v293
      %v295 = vpop.f32.mrf.mxu0
      %v296 = vadd.f32 %v230, %v295
      %297 = vmatmul.bf16.gmra.mxu0 %v275
      %v298 = vpop.f32.mrf.mxu0
      %v299 = vadd.f32 %v235, %v298
      %v300 = vpop.f32.mrf.mxu0
      %301 = vdwg.mxu0
      %302 = vmatpush.bf16.msra.mxu0 0
      %303 = vmatpush.bf16.msra.mxu0 0
      %304 = vmatpush.bf16.msra.mxu0 0
      %305 = vmatpush.bf16.msra.mxu0 0
      %306 = vmatpush.bf16.msra.mxu0 0
      %307 = vmatpush.bf16.msra.mxu0 %v282
      %308 = vmatpush.bf16.msra.mxu0 %v263
      %309 = vmatpush.bf16.msra.mxu0 %v261
      %310 = vmatmul.bf16.gmra.mxu0 %v272
      %v311 = vpop.f32.mrf.mxu0
      %v312 = vadd.f32 %v225, %v311
      %v313 = vpop.f32.mrf.mxu0
      %v314 = vadd.f32 %v230, %v313
      %315 = vmatmul.bf16.gmra.mxu0 %v275
      %v316 = vpop.f32.mrf.mxu0
      %v317 = vadd.f32 %v235, %v316
      %v318 = vpop.f32.mrf.mxu0
      %319 = vdwg.mxu0
      %320 = vst [vmem:[%s208] sm:$0xff] %v294
      %321 = vst [vmem:[%s208 + $0x8] sm:$0xff] %v312
      %322 = vst [vmem:[%s208 + $0x10] sm:$0xff] %v296
      %323 = vst [vmem:[%s208 + $0x18] sm:$0xff] %v314
      %324 = vst [vmem:[%s208 + $0x20] sm:$0x3] %v299
      %325 = vst [vmem:[%s208 + $0x28] sm:$0x3] %v317
      %s326 = smul.u32 2, %s19
      %p327 = scmp.lt.s32.totalorder %s18, 1
      %s328 = scalar_select %p327, %s18, 1
      %p329 = scmp.lt.s32.totalorder %s326, 1
      %s330 = scalar_select %p329, %s326, 1
      %s331 = smul.addr %s328, 6
      %s332 = sadd.s32 %s330, %s331
      %s333 = smul.addr %s332, 8
      %s334 = scalar_lea.vmem %s3, %s333
      // Predicated region
      $region33: #{tpu_custom_call.1} parent=31 // pred_check
        %p335 = pneg %p116
      $region34: #{tpu_custom_call.1} parent=31 // pred_check_branch
        %337 = sbr.rel (%p335) target = $region36
      $region35: #{tpu_custom_call.1} parent=31 // pred_region
        %s338 = smul.u32 2, %s19
      $region36: #{tpu_custom_call.1} parent=31 // pred_fallthru
        _
    $region32: #{tpu_custom_call.1} parent=5 // pred_fallthru
      _
    %p339 = scmp.le.s32.totalorder 2, %s9
    // Predicated region
    $region37: #{tpu_custom_call.1} parent=5 // pred_check
      %p340 = pneg %p339
    $region38: #{tpu_custom_call.1} parent=5 // pred_check_branch
      %342 = sbr.rel (%p340) target = $region40
    $region39: #{tpu_custom_call.1} parent=5 // pred_region
      %s343 = ssub.s32 %s9, 2
      // Predicated region
      $region41: #{tpu_custom_call.1} parent=39 // pred_check
        %p344 = pneg %p122
      $region42: #{tpu_custom_call.1} parent=39 // pred_check_branch
        %346 = sbr.rel (%p344) target = $region44
      $region43: #{tpu_custom_call.1} parent=39 // pred_region
        %s347 = smul.u32 2, %s21
        %p348 = scmp.lt.s32.totalorder %s20, 1
        %s349 = scalar_select %p348, %s20, 1
        %p350 = scmp.lt.s32.totalorder %s347, 1
        %s351 = scalar_select %p350, %s347, 1
        %s352 = smul.addr %s349, 6
        %s353 = sadd.s32 %s351, %s352
        %s354 = smul.addr %s353, 8
        %s355 = scalar_lea.vmem %s3, %s354
      $region44: #{tpu_custom_call.1} parent=39 // pred_fallthru
        _
    $region40: #{tpu_custom_call.1} parent=5 // pred_fallthru
      _
  $region6: #{tpu_custom_call.1} parent=0 // loop_footer
    %s13 = sadd.s32 1, %s9
  $region7: #{tpu_custom_call.1} parent=0 // loop_footer_branch
    %8 = sbr.rel target = $region3
  $region8: #{tpu_custom_call.1} parent=0 // loop_exit
    _

</llo_original>
